<compile_context>
chip_gen: v7x
topology: tpu7x:2x2x1
jax: 0.10.0
libtpu: 0.0.40
codegen_flags: <defaults>
</compile_context>

<pallas_src>
import jax
import jax.numpy as jnp
from jax.experimental import pallas as pl
from jax.experimental.pallas import tpu as pltpu


_LANE = 128
_SUBLANE = 8
_MAX_TILE_BYTES = 4 * 1024 * 1024   # <=4 MiB tiles: 2 input + 2 output double-buffers
                                    # stay well under v7x's 32 MiB default scoped VMEM.
_MAX_COLS = 4096                    # lane-dense width; amortizes ~0.35 us/step overhead.


def _identity_kernel(x_ref, o_ref):
    # Placeholder pass for the (abstract) training-path `logic()`.
    # TODO(synk): when `logic()` gets a concrete definition, generate the dropout
    # mask in-kernel via pltpu.prng_seed + pltpu.prng_random_bits and fuse the
    # scale/select (jnp.where) into this same tile pass so it stays one-pass
    # mem-bound (1 HBM read + 1 HBM write).
    o_ref[...] = x_ref[...]


def _lane_dense_2d(flat):
    """Reshape a padded 1-D array to a lane-dense (rows, cols) view.

    cols is a multiple of 128 (so stores are unmasked vst, not vst.msk) and is
    capped at _MAX_COLS.
    """
    total = flat.shape[0]
    cols = _LANE
    while total % (cols * 2) == 0 and cols * 2 <= _MAX_COLS:
        cols *= 2
    return flat.reshape(total // cols, cols)


def _pick_block_rows(rows, cols, itemsize):
    """Largest multiple-of-8 row tile that (a) divides rows exactly and
    (b) keeps one tile <= _MAX_TILE_BYTES.  Falls back to full extent."""
    cap = _MAX_TILE_BYTES // (cols * itemsize)
    cap = max(_SUBLANE, (cap // _SUBLANE) * _SUBLANE)
    if rows <= cap or rows % _SUBLANE != 0:
        return rows                      # full extent: always a legal block shape
    block_rows = cap
    while rows % block_rows != 0:        # exact blocks -> no masked edge tiles
        block_rows -= _SUBLANE
    return block_rows


def _identity_pallas(x):
    """Tiled, lane-dense, double-buffered Pallas identity copy (anchor only)."""
    orig_shape = x.shape
    flat = x.reshape(-1)
    n = flat.shape[0]

    # Pad so the 2D view is (8,128)-tileable regardless of the NCHW extents.
    pad = (-n) % (_SUBLANE * _LANE)
    if pad:
        flat = jnp.pad(flat, (0, pad))

    x2d = _lane_dense_2d(flat)
    rows, cols = x2d.shape
    block_rows = _pick_block_rows(rows, cols, x2d.dtype.itemsize)
    grid = (rows // block_rows,)

    out2d = pl.pallas_call(
        _identity_kernel,
        out_shape=jax.ShapeDtypeStruct(x2d.shape, x2d.dtype),
        grid=grid,
        in_specs=[pl.BlockSpec((block_rows, cols), lambda i: (i, 0))],
        out_specs=pl.BlockSpec((block_rows, cols), lambda i: (i, 0)),
        # Alias the output onto the input buffer: no second HBM allocation, and
        # under jit/donation the write side collapses onto the same buffer.
        input_output_aliases={0: 0},
        compiler_params=pltpu.CompilerParams(
            dimension_semantics=("parallel",)),
    )(x2d)

    out = out2d.reshape(-1)
    if pad:
        out = out[:n]
    return out.reshape(orig_shape)


class HybridDropoutBase:
    """JAX/Pallas port of PyTorch `_HybridDropout_Base`.

    Eval-mode forward is an identity, so `__call__` returns `x` directly with
    zero HBM traffic and zero kernel-launch overhead (the biggest win from the
    perf review).  `force_pallas=True` routes through the tiled Pallas identity
    kernel, which exists only as an anchor for the future training path.
    """

    def __init__(self, rate):
        self.rate = rate          # stored like the PyTorch module; unused in eval path
        self.training = False

    def logic(self, x):
        # TODO(synk): `_HybridDropout_Base.logic` is abstract/undefined in the
        # PyTorch base class, so the training branch has no concrete semantics.
        raise NotImplementedError("logic() is abstract in _HybridDropout_Base")

    def __call__(self, x, *, force_pallas=False):
        if self.training:
            return self.logic(x)
        if force_pallas:
            return _identity_pallas(x)
        return x                  # eval-mode forward: pure identity, no kernel launch


if __name__ == "__main__":
    key = jax.random.PRNGKey(0)
    x = jax.random.normal(key, (2, 4, 16, 16), dtype=jnp.float32)  # NCHW, like PyTorch

    # Snapshot the input to host before any aliased kernel runs.
    x_host = jax.device_get(x)

    mod = HybridDropoutBase(rate=0.1)

    # Fast path (what the module actually does in eval mode): no kernel launch.
    y_fast = mod(x)
    jax.block_until_ready(y_fast)

    # Exercise the Pallas identity kernel once (anchor / future training path).
    y_kernel = mod(x, force_pallas=True)
    jax.block_until_ready(y_kernel)

    ref = jnp.asarray(x_host)
    assert y_fast.shape == x.shape and y_fast.dtype == x.dtype
    assert y_kernel.shape == x.shape and y_kernel.dtype == x.dtype
    assert bool(jnp.array_equal(y_fast, ref)), "eval-mode forward must be identity"
    assert bool(jnp.array_equal(y_kernel, ref)), "Pallas identity path must match input"
    print("KERNEL_OK")
</pallas_src>

<mosaic_0001>
module attributes {stable_mosaic.version = 11 : i64} {
  func.func @_identity_kernel(%arg0: i32, %arg1: memref<1x2048xf32, #tpu.memory_space<vmem>>, %arg2: memref<1x2048xf32, #tpu.memory_space<vmem>>) attributes {dimension_semantics = [#tpu.dimension_semantics<parallel>], iteration_bounds = array<i64: 1>, scalar_prefetch = 0 : i64, scratch_operands = 0 : i64, tpu.core_type = #tpu.core_type<tc>, window_params = [{transform_indices = @transform_0, window_bounds = array<i64: 1, 2048>}, {transform_indices = @transform_1, window_bounds = array<i64: 1, 2048>}]} {
    %c0 = arith.constant 0 : index
    %c0_0 = arith.constant 0 : index
    %0 = vector.load %arg1[%c0, %c0_0] : memref<1x2048xf32, #tpu.memory_space<vmem>>, vector<1x2048xf32>
    %c0_1 = arith.constant 0 : index
    %c0_2 = arith.constant 0 : index
    %1 = vector.load %arg2[%c0_1, %c0_2] : memref<1x2048xf32, #tpu.memory_space<vmem>>, vector<1x2048xf32>
    tpu.vector_store %arg2[%c0_1, %c0_2], %0 {strides = array<i32>} : memref<1x2048xf32, #tpu.memory_space<vmem>>, vector<1x2048xf32>,
    return
  }
  func.func @transform_0(%arg0: i32) -> (i32, i32) {
    %c0_i32 = arith.constant 0 : i32
    %c0_i32_0 = arith.constant 0 : i32
    return %arg0, %c0_i32 : i32, i32
  }
  func.func @transform_1(%arg0: i32) -> (i32, i32) {
    %c0_i32 = arith.constant 0 : i32
    %c0_i32_0 = arith.constant 0 : i32
    return %arg0, %c0_i32 : i32, i32
  }
}

</mosaic_0001>

<llo_original>
// kernel: tpu_custom_call.1
$region0: #{tpu_custom_call.1}
  #allocation0 [shape = 'u32[]', space=smem, size = 0x4, offset = 0x4, fixed_abs, tag = 'smem constant byte address 0x4 - core index']
  #allocation1 [shape = 'u32[144,128]{1,0:T(1,128)}', space=vmem, size = 0x12000, scoped, tag = 'internal scratch']
  %s0 = inlined_call_operand.hbm [shape: f32[1,2048], index: 0, kind: input, shape index: {}, may-alias: {0,1}]
  %s1 = inlined_call_operand.hbm [shape: f32[1,2048], index: 1, kind: output, shape index: {}, may-alias: {0,1}]
  %s2 = sld [smem:[#allocation0]]
  $region18: #{tpu_custom_call.1} parent=0
    _
  %s4 = ssub.s32 1, %s2
  %s5 = scalar_select 0, %s4, %s2
  $region1: #{tpu_custom_call.1} parent=0
    #allocation2 [shape = 'u8[8192]{0}', space=vmem, size = 0x2000, scoped, tag = 'input window, operand 0, single buffered']
    #allocation3 [shape = 's32[1]{0}', space=sflag, size = 0x4, scoped, tag = 'scoped memory for tpu_custom_call.1']
    #allocation4 [shape = 's32[1]{0}', space=sflag, size = 0x4, scoped, tag = 'scoped memory for tpu_custom_call.1']
    #allocation5 [shape = 'u8[8192]{0}', space=vmem, size = 0x2000, scoped, tag = 'output window, operand 0, single buffered']
    %6 = vsyncpa [#allocation3], 0
    %7 = vsyncpa [#allocation4], 0
    // Predicated region
    $region2: #{tpu_custom_call.1} parent=1 // pred_check
      _
    $region3: #{tpu_custom_call.1} parent=1 // pred_check_branch
      %9 = sbr.rel (0) target = $region5
    $region4: #{tpu_custom_call.1} parent=1 // pred_region
      %s11 = ssub.s32 256, 256
      %12 = vsyncadd [#allocation3], %s11
      %s14 = sshll.u32 [#allocation2], 4
      %s15 = int_to_ptr.vmem [resolvable:$true] %s14
      %17 = dma.hbm_to_vmem [thread:$0]  %s0, 256, %s15, [#allocation3]
    $region5: #{tpu_custom_call.1} parent=1 // pred_fallthru
      _
    // Predicated region
    $region6: #{tpu_custom_call.1} parent=1 // pred_check
      _
    $region7: #{tpu_custom_call.1} parent=1 // pred_check_branch
      %19 = sbr.rel (0) target = $region9
    $region8: #{tpu_custom_call.1} parent=1 // pred_region
      %20 = dma.done [#allocation3], 256
    $region9: #{tpu_custom_call.1} parent=1 // pred_fallthru
      _
    %v21 = vld [vmem:[#allocation2] sm:$0xff]
    %v22 = vld [vmem:[#allocation2 + $0x8] sm:$0xff]
    %23 = vst [vmem:[#allocation5] sm:$0xff] %v21
    %24 = vst [vmem:[#allocation5 + $0x8] sm:$0xff] %v22
    // Predicated region
    $region10: #{tpu_custom_call.1} parent=1 // pred_check
      _
    $region11: #{tpu_custom_call.1} parent=1 // pred_check_branch
      %26 = sbr.rel (0) target = $region13
    $region12: #{tpu_custom_call.1} parent=1 // pred_region
      %s28 = ssub.s32 256, 256
      %29 = vsyncadd [#allocation4], %s28
      %s31 = sshll.u32 [#allocation5], 4
      %s32 = int_to_ptr.vmem [resolvable:$true] %s31
      %34 = dma.vmem_to_hbm [thread:$0]  %s32, 256, %s1, [#allocation4]
    $region13: #{tpu_custom_call.1} parent=1 // pred_fallthru
      _
    // Predicated region
    $region14: #{tpu_custom_call.1} parent=1 // pred_check
      _
    $region15: #{tpu_custom_call.1} parent=1 // pred_check_branch
      %36 = sbr.rel (0) target = $region17
    $region16: #{tpu_custom_call.1} parent=1 // pred_region
      %37 = dma.done [#allocation4], 256
    $region17: #{tpu_custom_call.1} parent=1 // pred_fallthru
      _
    %38 = vsyncpa [#allocation3], 1
    %39 = vsyncpa [#allocation4], 1

</llo_original>
